<compile_context>
chip_gen: v7x
topology: tpu7x:2x2x1
jax: 0.10.0
libtpu: 0.0.40
codegen_flags: <defaults>
</compile_context>

<pallas_src>
import functools

import jax
import jax.numpy as jnp
from jax.experimental import pallas as pl
from jax.experimental.pallas import tpu as pltpu


def _round_up(x, m):
    return (x + m - 1) // m * m


def _sinconv_kernel(x_ref, h_ref, w_ref, b_ref, o_ref, rhs_ref, *,
                    wi, kh, kw, if_act_sin, w0):
    """One lane-dense (Cout, TQ) output tile of the fused conv + bias + act.

    x_ref:   (1, Cin, TQ)        current flat chunk of the padded image
    h_ref:   (1, Cin, HALO)      right halo (first lanes of the next chunk)
    w_ref:   (Cout, KH*KW*Cin)   resident weights, tap-major along K
    b_ref:   (Cout, 1)           resident f32 bias
    o_ref:   (1, Cout, TQ)       f32 output tile (dense flat positions)
    rhs_ref: (KH*KW*Cin, TQ)     f32 VMEM scratch for the stacked shifted views
    """
    tq = o_ref.shape[2]
    cin = x_ref.shape[1]

    # (Cin, TQ + HALO); both widths are multiples of 128 -> lane-aligned concat.
    xcat = jnp.concatenate([x_ref[0], h_ref[0]], axis=-1)

    # Scatter the KH*KW statically shifted views into the stacked-RHS scratch
    # (tap-major along the contraction axis, matching the weight layout).
    for t in range(kh * kw):
        off = (t // kw) * wi + (t % kw)              # static flat tap offset <= HALO
        rhs_ref[pl.ds(t * cin, cin), :] = xcat[:, off:off + tq].astype(rhs_ref.dtype)

    # Single fused MXU contraction: (Cout, K) x (K, TQ) with K = Cin*KH*KW.
    z = jnp.dot(w_ref[...].astype(jnp.float32), rhs_ref[...],
                preferred_element_type=jnp.float32) + b_ref[...]
    if if_act_sin:
        y = jnp.sin(w0 * z)                          # Sine(w0)
    else:
        y = jnp.where(z > 0, z, 0.2 * z)             # LeakyReLU(0.2)
    o_ref[0, :, :] = y.astype(o_ref.dtype)


def sin_conv_forward(x_nchw, weight, bias, *, stride, padding,
                     w0=1.0, if_act_sin=False, tq=1024,
                     compute_dtype=jnp.float32):
    """Forward pass of sinConv.

    x_nchw: (N, Cin, H, W) float32
    weight: (Cout, Cin, KH, KW) float32   (PyTorch Conv2d layout)
    bias:   (Cout,) float32
    returns (N, Cout, OH, OW) float32
    """
    n, cin, h, w = x_nchw.shape
    cout, cin_w, kh, kw = weight.shape
    assert cin == cin_w
    s, p = int(stride), int(padding)

    oh = (h + 2 * p - kh) // s + 1
    ow = (w + 2 * p - kw) // s + 1
    wi = w + 2 * p                       # padded width == dense output row width
    hp = h + 2 * p
    ho_dense = (oh - 1) * s + 1          # dense (stride-1) output rows needed
    l_dense = ho_dense * wi              # flat dense output length per image
    span = (kh - 1) * wi + (kw - 1)      # max flat tap offset
    halo = _round_up(max(span, 1), 128)  # halo lanes needed from the next chunk

    # Lane tile (sweepable): multiple of 128, >= halo and a multiple of it so
    # the halo block index is exact, capped near the per-image dense length.
    tq_eff = min(_round_up(max(int(tq), 128), 128), _round_up(l_dense, 128))
    tq_eff = _round_up(max(tq_eff, halo), halo)
    lout = _round_up(l_dense, tq_eff)
    n_q = lout // tq_eff
    lin = _round_up(max(hp * wi, lout + halo), tq_eff)   # last tile's halo in-bounds
    halo_stride = tq_eff // halo

    # --- cheap prep (no im2col): spatial zero-pad, flatten rows, tail-pad, cast.
    xp = jnp.pad(x_nchw, ((0, 0), (0, 0), (p, p), (p, p)))
    xf = jnp.pad(xp.reshape(n, cin, hp * wi),
                 ((0, 0), (0, 0), (0, lin - hp * wi))).astype(compute_dtype)

    # Weights as (Cout, KH*KW*Cin), tap-major along K to match the stacked RHS.
    w2 = jnp.transpose(weight, (0, 2, 3, 1)).reshape(cout, kh * kw * cin)
    w2 = w2.astype(compute_dtype)
    bmat = bias.reshape(cout, 1).astype(jnp.float32)

    kernel = functools.partial(_sinconv_kernel, wi=wi, kh=kh, kw=kw,
                               if_act_sin=bool(if_act_sin), w0=float(w0))

    # Per-generation VMEM budget (~7/8 of physical: ~112 MiB v5e/v6e, ~56 MiB v7x).
    try:
        vmem_cap = int(pltpu.get_tpu_info().vmem_capacity_bytes)
    except Exception:
        vmem_cap = 64 << 20
    vmem_budget = (vmem_cap * 7) // 8

    esize = jnp.dtype(compute_dtype).itemsize
    per_tile = (cin * (tq_eff + halo) * esize            # streamed chunk + halo
                + cout * tq_eff * 4                      # f32 output tile
                + kh * kw * cin * tq_eff * 4)            # f32 stacked-RHS scratch
    fixed = kh * kw * cout * cin * esize + cout * 4
    vmem_limit = int(min(max(4 * per_tile + 2 * fixed + (8 << 20), 32 << 20),
                         vmem_budget))

    cost = pl.CostEstimate(
        flops=2 * n * lout * cout * cin * kh * kw,
        transcendentals=(n * lout * cout) if if_act_sin else 0,
        bytes_accessed=(n * n_q * cin * (tq_eff + halo) * esize
                        + kh * kw * cout * cin * esize + cout * 4
                        + n * cout * lout * 4))

    out_flat = pl.pallas_call(
        kernel,
        out_shape=jax.ShapeDtypeStruct((n, cout, lout), jnp.float32),
        grid_spec=pltpu.PrefetchScalarGridSpec(
            num_scalar_prefetch=0,
            grid=(n, n_q),
            in_specs=[
                # Current flat chunk of this image.
                pl.BlockSpec((1, cin, tq_eff), lambda b, q: (b, 0, q)),
                # Right halo: first `halo` lanes of the next chunk (same array
                # passed twice; only round_up(span, 128) extra lanes per step).
                pl.BlockSpec((1, cin, halo),
                             lambda b, q: (b, 0, (q + 1) * halo_stride)),
                pl.BlockSpec((cout, kh * kw * cin), lambda b, q: (0, 0)),
                pl.BlockSpec((cout, 1), lambda b, q: (0, 0)),
            ],
            out_specs=pl.BlockSpec((1, cout, tq_eff), lambda b, q: (b, 0, q)),
            scratch_shapes=[pltpu.VMEM((kh * kw * cin, tq_eff), jnp.float32)],
        ),
        compiler_params=pltpu.CompilerParams(
            dimension_semantics=("parallel", "parallel"),
            vmem_limit_bytes=vmem_limit),
        cost_estimate=cost,
    )(xf, xf, w2, bmat)

    # Crop padded columns (and subsample for stride>1).  Already NCHW-ordered.
    dense = out_flat[:, :, :l_dense].reshape(n, cout, ho_dense, wi)
    out = dense[:, :, 0:(oh - 1) * s + 1:s, 0:(ow - 1) * s + 1:s]
    return out


def _reference(x_nchw, weight, bias, *, stride, padding, w0, if_act_sin):
    y = jax.lax.conv_general_dilated(
        x_nchw, weight,
        window_strides=(stride, stride),
        padding=[(padding, padding), (padding, padding)],
        dimension_numbers=("NCHW", "OIHW", "NCHW"),
    ) + bias.reshape(1, -1, 1, 1)
    if if_act_sin:
        return jnp.sin(w0 * y)
    return jnp.where(y > 0, y, 0.2 * y)


if __name__ == "__main__":
    # Module config: sinConv(inDim=4, outDim=8, kernel_size=3, stride=1,
    #                        padding=1, w0=30.0, c=6.0, ifActSin=...)
    N, Cin, H, W = 2, 4, 16, 16
    Cout, KH, KW = 8, 3, 3
    stride, padding = 1, 1
    w0 = 30.0

    key = jax.random.PRNGKey(0)
    kx, kw_, kb = jax.random.split(key, 3)
    x = jax.random.normal(kx, (N, Cin, H, W), dtype=jnp.float32)
    # Deterministic synthetic parameters (siren_uniform-style scale, not a checkpoint).
    fan_in = Cin * KH * KW
    bound = (6.0 / fan_in) ** 0.5
    weight = jax.random.uniform(kw_, (Cout, Cin, KH, KW), jnp.float32,
                                minval=-bound, maxval=bound)
    bias = jax.random.uniform(kb, (Cout,), jnp.float32, minval=-0.1, maxval=0.1)

    # Quantize x/weight to bf16-representable f32 values so the comparison is
    # insensitive to XLA/Mosaic matmul precision defaults (the cast is lossless
    # on both sides and accumulation is f32 in both paths).
    x_q = x.astype(jnp.bfloat16).astype(jnp.float32)
    w_q = weight.astype(jnp.bfloat16).astype(jnp.float32)

    for if_act_sin in (False, True):   # LeakyReLU(0.2) path and Sine(w0) path
        out = sin_conv_forward(x_q, w_q, bias, stride=stride, padding=padding,
                               w0=w0, if_act_sin=if_act_sin)
        out = jax.block_until_ready(out)
        ref = _reference(x_q, w_q, bias, stride=stride, padding=padding,
                         w0=w0, if_act_sin=if_act_sin)
        assert out.shape == (N, Cout, H, W), out.shape
        err = float(jnp.max(jnp.abs(out - ref)))
        assert jnp.allclose(out, ref, atol=1e-3, rtol=1e-3), err

    print("KERNEL_OK")
</pallas_src>

<mosaic_0001>
module attributes {stable_mosaic.version = 11 : i64} {
  func.func @_sinconv_kernel(%arg0: i32, %arg1: i32, %arg2: memref<1x4x384xf32, #tpu.memory_space<vmem>>, %arg3: memref<1x4x128xf32, #tpu.memory_space<vmem>>, %arg4: memref<8x36xf32, #tpu.memory_space<vmem>>, %arg5: memref<8x1xf32, #tpu.memory_space<vmem>>, %arg6: memref<1x8x384xf32, #tpu.memory_space<vmem>>, %arg7: memref<36x384xf32, #tpu.memory_space<vmem>>) attributes {dimension_semantics = [#tpu.dimension_semantics<parallel>, #tpu.dimension_semantics<parallel>], iteration_bounds = array<i64: 2, 1>, scalar_prefetch = 0 : i64, scratch_operands = 1 : i64, tpu.core_type = #tpu.core_type<tc>, window_params = [{transform_indices = @transform_0, window_bounds = array<i64: 1, 4, 384>}, {transform_indices = @transform_1, window_bounds = array<i64: 1, 4, 128>}, {pipeline_mode = #tpu.pipeline_mode<synchronous>, transform_indices = @transform_2, window_bounds = array<i64: 8, 36>}, {pipeline_mode = #tpu.pipeline_mode<synchronous>, transform_indices = @transform_3, window_bounds = array<i64: 8, 1>}, {transform_indices = @transform_4, window_bounds = array<i64: 1, 8, 384>}]} {
    %c0 = arith.constant 0 : index
    %c0_0 = arith.constant 0 : index
    %c0_1 = arith.constant 0 : index
    %0 = vector.load %arg2[%c0, %c0_0, %c0_1] : memref<1x4x384xf32, #tpu.memory_space<vmem>>, vector<1x4x384xf32>
    %1 = vector.shape_cast %0 : vector<1x4x384xf32> to vector<4x384xf32>
    %c0_2 = arith.constant 0 : index
    %c0_3 = arith.constant 0 : index
    %c0_4 = arith.constant 0 : index
    %2 = vector.load %arg3[%c0_2, %c0_3, %c0_4] : memref<1x4x128xf32, #tpu.memory_space<vmem>>, vector<1x4x128xf32>
    %3 = vector.shape_cast %2 : vector<1x4x128xf32> to vector<4x128xf32>
    %4 = tpu.concatenate %1, %3 in 1 : vector<4x384xf32>, vector<4x128xf32> -> vector<4x512xf32>
    %5 = vector.extract_strided_slice %4 {offsets = [0, 0], sizes = [4, 384], strides = [1, 1]} : vector<4x512xf32> to vector<4x384xf32>
    %c0_5 = arith.constant 0 : index
    %c0_6 = arith.constant 0 : index
    %6 = vector.load %arg7[%c0_5, %c0_6] : memref<36x384xf32, #tpu.memory_space<vmem>>, vector<4x384xf32>
    tpu.vector_store %arg7[%c0_5, %c0_6], %5 {strides = array<i32>} : memref<36x384xf32, #tpu.memory_space<vmem>>, vector<4x384xf32>,
    %7 = vector.extract_strided_slice %4 {offsets = [0, 1], sizes = [4, 384], strides = [1, 1]} : vector<4x512xf32> to vector<4x384xf32>
    %c4 = arith.constant 4 : index
    %c0_7 = arith.constant 0 : index
    %8 = vector.load %arg7[%c4, %c0_7] : memref<36x384xf32, #tpu.memory_space<vmem>>, vector<4x384xf32>
    tpu.vector_store %arg7[%c4, %c0_7], %7 {strides = array<i32>} : memref<36x384xf32, #tpu.memory_space<vmem>>, vector<4x384xf32>,
    %9 = vector.extract_strided_slice %4 {offsets = [0, 2], sizes = [4, 384], strides = [1, 1]} : vector<4x512xf32> to vector<4x384xf32>
    %c8 = arith.constant 8 : index
    %c0_8 = arith.constant 0 : index
    %10 = vector.load %arg7[%c8, %c0_8] : memref<36x384xf32, #tpu.memory_space<vmem>>, vector<4x384xf32>
    tpu.vector_store %arg7[%c8, %c0_8], %9 {strides = array<i32>} : memref<36x384xf32, #tpu.memory_space<vmem>>, vector<4x384xf32>,
    %11 = vector.extract_strided_slice %4 {offsets = [0, 18], sizes = [4, 384], strides = [1, 1]} : vector<4x512xf32> to vector<4x384xf32>
    %c12 = arith.constant 12 : index
    %c0_9 = arith.constant 0 : index
    %12 = vector.load %arg7[%c12, %c0_9] : memref<36x384xf32, #tpu.memory_space<vmem>>, vector<4x384xf32>
    tpu.vector_store %arg7[%c12, %c0_9], %11 {strides = array<i32>} : memref<36x384xf32, #tpu.memory_space<vmem>>, vector<4x384xf32>,
    %13 = vector.extract_strided_slice %4 {offsets = [0, 19], sizes = [4, 384], strides = [1, 1]} : vector<4x512xf32> to vector<4x384xf32>
    %c16 = arith.constant 16 : index
    %c0_10 = arith.constant 0 : index
    %14 = vector.load %arg7[%c16, %c0_10] : memref<36x384xf32, #tpu.memory_space<vmem>>, vector<4x384xf32>
    tpu.vector_store %arg7[%c16, %c0_10], %13 {strides = array<i32>} : memref<36x384xf32, #tpu.memory_space<vmem>>, vector<4x384xf32>,
    %15 = vector.extract_strided_slice %4 {offsets = [0, 20], sizes = [4, 384], strides = [1, 1]} : vector<4x512xf32> to vector<4x384xf32>
    %c20 = arith.constant 20 : index
    %c0_11 = arith.constant 0 : index
    %16 = vector.load %arg7[%c20, %c0_11] : memref<36x384xf32, #tpu.memory_space<vmem>>, vector<4x384xf32>
    tpu.vector_store %arg7[%c20, %c0_11], %15 {strides = array<i32>} : memref<36x384xf32, #tpu.memory_space<vmem>>, vector<4x384xf32>,
    %17 = vector.extract_strided_slice %4 {offsets = [0, 36], sizes = [4, 384], strides = [1, 1]} : vector<4x512xf32> to vector<4x384xf32>
    %c24 = arith.constant 24 : index
    %c0_12 = arith.constant 0 : index
    %18 = vector.load %arg7[%c24, %c0_12] : memref<36x384xf32, #tpu.memory_space<vmem>>, vector<4x384xf32>
    tpu.vector_store %arg7[%c24, %c0_12], %17 {strides = array<i32>} : memref<36x384xf32, #tpu.memory_space<vmem>>, vector<4x384xf32>,
    %19 = vector.extract_strided_slice %4 {offsets = [0, 37], sizes = [4, 384], strides = [1, 1]} : vector<4x512xf32> to vector<4x384xf32>
    %c28 = arith.constant 28 : index
    %c0_13 = arith.constant 0 : index
    %20 = vector.load %arg7[%c28, %c0_13] : memref<36x384xf32, #tpu.memory_space<vmem>>, vector<4x384xf32>
    tpu.vector_store %arg7[%c28, %c0_13], %19 {strides = array<i32>} : memref<36x384xf32, #tpu.memory_space<vmem>>, vector<4x384xf32>,
    %21 = vector.extract_strided_slice %4 {offsets = [0, 38], sizes = [4, 384], strides = [1, 1]} : vector<4x512xf32> to vector<4x384xf32>
    %c32 = arith.constant 32 : index
    %c0_14 = arith.constant 0 : index
    %22 = vector.load %arg7[%c32, %c0_14] : memref<36x384xf32, #tpu.memory_space<vmem>>, vector<4x384xf32>
    tpu.vector_store %arg7[%c32, %c0_14], %21 {strides = array<i32>} : memref<36x384xf32, #tpu.memory_space<vmem>>, vector<4x384xf32>,
    %c0_15 = arith.constant 0 : index
    %c0_16 = arith.constant 0 : index
    %23 = vector.load %arg4[%c0_15, %c0_16] : memref<8x36xf32, #tpu.memory_space<vmem>>, vector<8x36xf32>
    %c0_17 = arith.constant 0 : index
    %c0_18 = arith.constant 0 : index
    %24 = vector.load %arg7[%c0_17, %c0_18] : memref<36x384xf32, #tpu.memory_space<vmem>>, vector<36x384xf32>
    %cst = arith.constant dense<0.000000e+00> : vector<8x384xf32>
    %25 = tpu.matmul %23, %24, %cst {dimension_numbers = #tpu.dot_dimension_numbers<[1], [0], [0], [1], [0, 0, 1, 1], [], []>} : vector<8x36xf32>, vector<36x384xf32>, vector<8x384xf32> -> vector<8x384xf32>
    %c0_19 = arith.constant 0 : index
    %c0_20 = arith.constant 0 : index
    %26 = vector.load %arg5[%c0_19, %c0_20] : memref<8x1xf32, #tpu.memory_space<vmem>>, vector<8x1xf32>
    %27 = vector.broadcast %26 : vector<8x1xf32> to vector<8x384xf32>
    %28 = arith.addf %25, %27 : vector<8x384xf32>
    %cst_21 = arith.constant 0.000000e+00 : f32
    %29 = vector.broadcast %cst_21 : f32 to vector<8x384xf32>
    %30 = arith.cmpf ogt, %28, %29 : vector<8x384xf32>
    %cst_22 = arith.constant 2.000000e-01 : f32
    %31 = vector.broadcast %cst_22 : f32 to vector<8x384xf32>
    %32 = arith.mulf %31, %28 : vector<8x384xf32>
    %33 = arith.select %30, %28, %32 : vector<8x384xi1>, vector<8x384xf32>
    %c0_23 = arith.constant 0 : index
    %c0_24 = arith.constant 0 : index
    %c0_25 = arith.constant 0 : index
    %34 = vector.load %arg6[%c0_23, %c0_24, %c0_25] : memref<1x8x384xf32, #tpu.memory_space<vmem>>, vector<1x8x384xf32>
    %35 = vector.shape_cast %34 : vector<1x8x384xf32> to vector<8x384xf32>
    %36 = vector.shape_cast %33 : vector<8x384xf32> to vector<1x8x384xf32>
    tpu.vector_store %arg6[%c0_23, %c0_24, %c0_25], %36 {strides = array<i32>} : memref<1x8x384xf32, #tpu.memory_space<vmem>>, vector<1x8x384xf32>,
    return
  }
  func.func @transform_0(%arg0: i32, %arg1: i32) -> (i32, i32, i32) {
    %c0_i32 = arith.constant 0 : i32
    %c0_i32_0 = arith.constant 0 : i32
    return %arg0, %c0_i32, %arg1 : i32, i32, i32
  }
  func.func @transform_1(%arg0: i32, %arg1: i32) -> (i32, i32, i32) {
    %c1_i32 = arith.constant 1 : i32
    %0 = arith.addi %arg1, %c1_i32 : i32
    %c3_i32 = arith.constant 3 : i32
    %1 = arith.muli %0, %c3_i32 : i32
    %c0_i32 = arith.constant 0 : i32
    %c0_i32_0 = arith.constant 0 : i32
    return %arg0, %c0_i32, %1 : i32, i32, i32
  }
  func.func @transform_2(%arg0: i32, %arg1: i32) -> (i32, i32) {
    %c0_i32 = arith.constant 0 : i32
    %c0_i32_0 = arith.constant 0 : i32
    %c0_i32_1 = arith.constant 0 : i32
    return %c0_i32, %c0_i32_0 : i32, i32
  }
  func.func @transform_3(%arg0: i32, %arg1: i32) -> (i32, i32) {
    %c0_i32 = arith.constant 0 : i32
    %c0_i32_0 = arith.constant 0 : i32
    %c0_i32_1 = arith.constant 0 : i32
    return %c0_i32, %c0_i32_0 : i32, i32
  }
  func.func @transform_4(%arg0: i32, %arg1: i32) -> (i32, i32, i32) {
    %c0_i32 = arith.constant 0 : i32
    %c0_i32_0 = arith.constant 0 : i32
    return %arg0, %c0_i32, %arg1 : i32, i32, i32
  }
}

</mosaic_0001>

<llo_original>
// kernel: tpu_custom_call.1
$region0: #{tpu_custom_call.1}
  #allocation0 [shape = 'u32[]', space=smem, size = 0x4, offset = 0x4, fixed_abs, tag = 'smem constant byte address 0x4 - core index']
  #allocation1 [shape = 'u32[144,128]{1,0:T(1,128)}', space=vmem, size = 0x12000, scoped, tag = 'internal scratch']
  #allocation2 [shape = 'f32[36,384]{1,0:T(8,128)}', space=vmem, size = 0xf000, scoped, tag = 'scratch operand']
  %s0 = inlined_call_operand.hbm [shape: f32[2,4,768], index: 0, kind: input, shape index: {}]
  %s1 = inlined_call_operand.hbm [shape: f32[2,4,768], index: 1, kind: input, shape index: {}]
  %s2 = inlined_call_operand.vmem [shape: f32[8,36], index: 2, kind: input, shape index: {}]
  %s3 = inlined_call_operand.vmem [shape: f32[8,1], index: 3, kind: input, shape index: {}]
  %s4 = inlined_call_operand.hbm [shape: f32[2,8,384], index: 4, kind: output, shape index: {}]
  %s5 = sld [smem:[#allocation0]]
  $region57: #{tpu_custom_call.1} parent=0
    _
  %s7 = ssub.s32 1, %s5
  %s8 = scalar_select 0, %s7, %s5
  $region1: #{tpu_custom_call.1} parent=0
    #allocation3 [shape = 'u8[12288]{0}', space=vmem, size = 0x3000, scoped, tag = 'input window, operand 0']
    #allocation4 [shape = 's32[2]{0}', space=sflag, size = 0x8, scoped, tag = 'scoped memory for tpu_custom_call.1']
    #allocation5 [shape = 's32[2]{0}', space=sflag, size = 0x8, scoped, tag = 'scoped memory for tpu_custom_call.1']
    #allocation6 [shape = 'u8[4096]{0}', space=vmem, size = 0x1000, scoped, tag = 'input window, operand 1']
    #allocation7 [shape = 's32[2]{0}', space=sflag, size = 0x8, scoped, tag = 'scoped memory for tpu_custom_call.1']
    #allocation8 [shape = 'u8[24576]{0}', space=vmem, size = 0x6000, scoped, tag = 'output window, operand 0']
    %9 = vsyncpa [#allocation4], 0
    %s10 = scalar_lea.sflag [#allocation4], 1
    %11 = vsyncpa %s10, 0
    %12 = vsyncpa [#allocation7], 0
    %s13 = scalar_lea.sflag [#allocation7], 1
    %14 = vsyncpa %s13, 0
    %15 = vsyncpa [#allocation5], 0
    %s16 = scalar_lea.sflag [#allocation5], 1
    %17 = vsyncpa %s16, 0
    loop: start=0, step=1, limit=4
    $region2: #{tpu_custom_call.1} parent=1 // loop_pre_header
      _
    $region3: #{tpu_custom_call.1} parent=1 // loop_header
      %s19 = sphi 0, %s23
      %p20 = scmp.ge.s32.totalorder %s19, 4
      %s26 = sphi 0, %s38
      %s27 = sphi 0, %s34
      %s28 = sphi 0, %s26
      %s29 = sphi 0, %s27
      %s30 = sphi 0, %s28
      %s31 = sphi 0, %s29
      %s43 = sphi 0, %s45
      %s46 = sphi 0, %s43
      %s47 = sphi 0, %s46
      %s63 = sphi 0, %s47
      %s75 = sphi 0, %s77
      %s78 = sphi 0, %s75
      %s79 = sphi 0, %s78
      %s95 = sphi 0, %s79
      %s99 = sphi 0, %s99
      %s101 = sphi 0, %s99
      %s102 = sphi 0, %s101
      %s116 = sphi 0, %s102
      %s120 = sphi 0, %s120
      %s122 = sphi 0, %s120
      %s123 = sphi 0, %s122
      %s137 = sphi 0, %s123
      %s145 = sphi 0, %s147
      %s148 = sphi 0, %s145
      %s149 = sphi 0, %s148
      %s165 = sphi 0, %s149
    $region4: #{tpu_custom_call.1} parent=1 // loop_header_branch
      %22 = sbr.rel (%p20) target = $region8
    $region5: #{tpu_custom_call.1} parent=1 // loop_body
      %s24 = ssub.s32 %s19, 1
      %s25 = ssub.s32 %s19, 2
      %s32 = sadd.s32 1, %s27
      %p33 = scmp.ge.s32.totalorder %s32, 1
      %s34 = scalar_select %p33, 0, %s32
      %s35 = sadd.s32 1, %s26
      %s36 = scalar_select %p33, %s35, %s26
      %p37 = scmp.ge.s32.totalorder %s36, 2
      %s38 = scalar_select %p37, 0, %s36
      %s39 = ssub.s32 %s26, %s38
      %s40 = ssub.s32 %s27, %s34
      %s41 = sor.u32 %s39, %s40
      %p42 = scmp.eq.s32.totalorder %s41, 0
      %s44 = sadd.s32 %s43, 1
      %s45 = scalar_select %p42, %s43, %s44
      %p48 = pneg %p42
      %p49 = scmp.eq.s32.totalorder %s19, 1
      %p50 = por %p48, %p49
      %p51 = scmp.ne.s32.totalorder %s43, %s46
      %p52 = scmp.eq.s32.totalorder %s19, 0
      %p53 = por %p51, %p52
      %p54 = scmp.ne.s32.totalorder %s43, %s46
      %p55 = scmp.eq.s32.totalorder %s24, 1
      %p56 = por %p54, %p55
      %p57 = scmp.ne.s32.totalorder %s46, %s47
      %p58 = scmp.eq.s32.totalorder %s24, 0
      %p59 = por %p57, %p58
      %p60 = scmp.ne.s32.totalorder %s46, %s47
      %p61 = scmp.eq.s32.totalorder %s25, 1
      %p62 = por %p60, %p61
      %p64 = scmp.ne.s32.totalorder %s47, %s63
      %p65 = scmp.eq.s32.totalorder %s25, 0
      %p66 = por %p64, %p65
      %s67 = sadd.s32 %s27, 1
      %s68 = smul.u32 %s67, 3
      %s69 = sadd.s32 %s34, 1
      %s70 = smul.u32 %s69, 3
      %s71 = ssub.s32 %s26, %s38
      %s72 = ssub.s32 %s68, %s70
      %s73 = sor.u32 %s71, %s72
      %p74 = scmp.eq.s32.totalorder %s73, 0
      %s76 = sadd.s32 %s75, 1
      %s77 = scalar_select %p74, %s75, %s76
      %p80 = pneg %p74
      %p81 = scmp.eq.s32.totalorder %s19, 1
      %p82 = por %p80, %p81
      %p83 = scmp.ne.s32.totalorder %s75, %s78
      %p84 = scmp.eq.s32.totalorder %s19, 0
      %p85 = por %p83, %p84
      %p86 = scmp.ne.s32.totalorder %s75, %s78
      %p87 = scmp.eq.s32.totalorder %s24, 1
      %p88 = por %p86, %p87
      %p89 = scmp.ne.s32.totalorder %s78, %s79
      %p90 = scmp.eq.s32.totalorder %s24, 0
      %p91 = por %p89, %p90
      %p92 = scmp.ne.s32.totalorder %s78, %s79
      %p93 = scmp.eq.s32.totalorder %s25, 1
      %p94 = por %p92, %p93
      %p96 = scmp.ne.s32.totalorder %s79, %s95
      %p97 = scmp.eq.s32.totalorder %s25, 0
      %p98 = por %p96, %p97
      %s100 = sadd.s32 %s99, 1
      %p103 = scmp.eq.s32.totalorder %s19, 1
      %p104 = scmp.ne.s32.totalorder %s99, %s101
      %p105 = scmp.eq.s32.totalorder %s19, 0
      %p106 = por %p104, %p105
      %p107 = scmp.ne.s32.totalorder %s99, %s101
      %p108 = scmp.eq.s32.totalorder %s24, 1
      %p109 = por %p107, %p108
      %p110 = scmp.ne.s32.totalorder %s101, %s102
      %p111 = scmp.eq.s32.totalorder %s24, 0
      %p112 = por %p110, %p111
      %p113 = scmp.ne.s32.totalorder %s101, %s102
      %p114 = scmp.eq.s32.totalorder %s25, 1
      %p115 = por %p113, %p114
      %p117 = scmp.ne.s32.totalorder %s102, %s116
      %p118 = scmp.eq.s32.totalorder %s25, 0
      %p119 = por %p117, %p118
      %s121 = sadd.s32 %s120, 1
      %p124 = scmp.eq.s32.totalorder %s19, 1
      %p125 = scmp.ne.s32.totalorder %s120, %s122
      %p126 = scmp.eq.s32.totalorder %s19, 0
      %p127 = por %p125, %p126
      %p128 = scmp.ne.s32.totalorder %s120, %s122
      %p129 = scmp.eq.s32.totalorder %s24, 1
      %p130 = por %p128, %p129
      %p131 = scmp.ne.s32.totalorder %s122, %s123
      %p132 = scmp.eq.s32.totalorder %s24, 0
      %p133 = por %p131, %p132
      %p134 = scmp.ne.s32.totalorder %s122, %s123
      %p135 = scmp.eq.s32.totalorder %s25, 1
      %p136 = por %p134, %p135
      %p138 = scmp.ne.s32.totalorder %s123, %s137
      %p139 = scmp.eq.s32.totalorder %s25, 0
      %p140 = por %p138, %p139
      %s141 = ssub.s32 %s26, %s38
      %s142 = ssub.s32 %s27, %s34
      %s143 = sor.u32 %s141, %s142
      %p144 = scmp.eq.s32.totalorder %s143, 0
      %s146 = sadd.s32 %s145, 1
      %s147 = scalar_select %p144, %s145, %s146
      %p150 = pneg %p144
      %p151 = scmp.eq.s32.totalorder %s19, 1
      %p152 = por %p150, %p151
      %p153 = scmp.ne.s32.totalorder %s145, %s148
      %p154 = scmp.eq.s32.totalorder %s19, 0
      %p155 = por %p153, %p154
      %p156 = scmp.ne.s32.totalorder %s145, %s148
      %p157 = scmp.eq.s32.totalorder %s24, 1
      %p158 = por %p156, %p157
      %p159 = scmp.ne.s32.totalorder %s148, %s149
      %p160 = scmp.eq.s32.totalorder %s24, 0
      %p161 = por %p159, %p160
      %p162 = scmp.ne.s32.totalorder %s148, %s149
      %p163 = scmp.eq.s32.totalorder %s25, 1
      %p164 = por %p162, %p163
      %p166 = scmp.ne.s32.totalorder %s149, %s165
      %p167 = scmp.eq.s32.totalorder %s25, 0
      %p168 = por %p166, %p167
      %p169 = scmp.le.s32.totalorder 1, %s19
      %p170 = scmp.lt.s32.totalorder %s19, 3
      %p171 = pnand %p169, %p170
      %p172 = pneg %p171
      // Predicated region
      $region9: #{tpu_custom_call.1} parent=5 // pred_check
        _
      $region10: #{tpu_custom_call.1} parent=5 // pred_check_branch
        %174 = sbr.rel (%p171) target = $region12
      $region11: #{tpu_custom_call.1} parent=5 // pred_region
        %s175 = ssub.s32 %s19, 1
        // Predicated region
        $region13: #{tpu_custom_call.1} parent=11 // pred_check
          %p176 = pneg %p112
        $region14: #{tpu_custom_call.1} parent=11 // pred_check_branch
          %178 = sbr.rel (%p176) target = $region16
        $region15: #{tpu_custom_call.1} parent=11 // pred_region
          _
        $region16: #{tpu_custom_call.1} parent=11 // pred_fallthru
          _
        // Predicated region
        $region17: #{tpu_custom_call.1} parent=11 // pred_check
          %p179 = pneg %p133
        $region18: #{tpu_custom_call.1} parent=11 // pred_check_branch
          %181 = sbr.rel (%p179) target = $region20
        $region19: #{tpu_custom_call.1} parent=11 // pred_region
          _
        $region20: #{tpu_custom_call.1} parent=11 // pred_fallthru
          _
      $region12: #{tpu_custom_call.1} parent=5 // pred_fallthru
        _
      %p182 = scmp.lt.s32.totalorder %s19, 2
      // Predicated region
      $region21: #{tpu_custom_call.1} parent=5 // pred_check
        %p183 = pneg %p182
      $region22: #{tpu_custom_call.1} parent=5 // pred_check_branch
        %185 = sbr.rel (%p183) target = $region24
      $region23: #{tpu_custom_call.1} parent=5 // pred_region
        // Predicated region
        $region25: #{tpu_custom_call.1} parent=23 // pred_check
          %p186 = pneg %p53
        $region26: #{tpu_custom_call.1} parent=23 // pred_check_branch
          %188 = sbr.rel (%p186) target = $region28
        $region27: #{tpu_custom_call.1} parent=23 // pred_region
          %s189 = sand.u32 %s43, 1
          %s190 = scalar_lea.sflag [#allocation4], %s189
          %s191 = sand.u32 %s43, 1
          %s192 = smul.addr %s191, 12
          %s193 = scalar_lea.vmem [#allocation3], %s192
          %s194 = smul.u32 3, %s27
          %s196 = ssub.s32 192, 192
          %197 = vsyncadd %s190, %s196
          %s198 = smul.addr %s26, 6
          %s199 = sadd.s32 %s194, %s198
          %s200 = smul.addr %s199, 64
          %s201 = scalar_lea.hbm %s0, %s200
          %s203 = sshll.u32 %s193, 4
          %s204 = int_to_ptr.vmem [resolvable:$true] %s203
          %206 = dma.hbm_to_vmem [thread:$0]  %s201, 192, %s204, %s190
        $region28: #{tpu_custom_call.1} parent=23 // pred_fallthru
          _
        // Predicated region
        $region29: #{tpu_custom_call.1} parent=23 // pred_check
          %p207 = pneg %p85
        $region30: #{tpu_custom_call.1} parent=23 // pred_check_branch
          %209 = sbr.rel (%p207) target = $region32
        $region31: #{tpu_custom_call.1} parent=23 // pred_region
          %s210 = sand.u32 %s75, 1
          %s211 = scalar_lea.sflag [#allocation7], %s210
          %s212 = sand.u32 %s75, 1
          %s213 = smul.addr %s212, 4
          %s214 = scalar_lea.vmem [#allocation6], %s213
          %s215 = sadd.s32 %s27, 1
          %s216 = smul.u32 %s215, 3
          %s218 = ssub.s32 64, 64
          %219 = vsyncadd %s211, %s218
          %s220 = smul.addr %s26, 6
          %s221 = sadd.s32 %s216, %s220
          %s222 = smul.addr %s221, 64
          %s223 = scalar_lea.hbm %s1, %s222
          %s225 = sshll.u32 %s214, 4
          %s226 = int_to_ptr.vmem [resolvable:$true] %s225
          %228 = dma.hbm_to_vmem [thread:$0]  %s223, 64, %s226, %s211
        $region32: #{tpu_custom_call.1} parent=23 // pred_fallthru
          _
      $region24: #{tpu_custom_call.1} parent=5 // pred_fallthru
        _
      %p229 = scmp.le.s32.totalorder 1, %s19
      %p230 = scmp.lt.s32.totalorder %s19, 3
      %p231 = pnand %p229, %p230
      %p232 = pneg %p231
      // Predicated region
      $region33: #{tpu_custom_call.1} parent=5 // pred_check
        _
      $region34: #{tpu_custom_call.1} parent=5 // pred_check_branch
        %234 = sbr.rel (%p231) target = $region36
      $region35: #{tpu_custom_call.1} parent=5 // pred_region
        %s235 = ssub.s32 %s19, 1
        %s236 = sand.u32 %s46, 1
        %s237 = scalar_lea.sflag [#allocation4], %s236
        %s238 = sand.u32 %s46, 1
        %s239 = smul.addr %s238, 12
        %s240 = scalar_lea.vmem [#allocation3], %s239
        // Predicated region
        $region37: #{tpu_custom_call.1} parent=35 // pred_check
          %p241 = pneg %p59
        $region38: #{tpu_custom_call.1} parent=35 // pred_check_branch
          %243 = sbr.rel (%p241) target = $region40
        $region39: #{tpu_custom_call.1} parent=35 // pred_region
          %244 = dma.done %s237, 192
        $region40: #{tpu_custom_call.1} parent=35 // pred_fallthru
          _
        %s245 = sand.u32 %s78, 1
        %s246 = scalar_lea.sflag [#allocation7], %s245
        %s247 = sand.u32 %s78, 1
        %s248 = smul.addr %s247, 4
        %s249 = scalar_lea.vmem [#allocation6], %s248
        // Predicated region
        $region41: #{tpu_custom_call.1} parent=35 // pred_check
          %p250 = pneg %p91
        $region42: #{tpu_custom_call.1} parent=35 // pred_check_branch
          %252 = sbr.rel (%p250) target = $region44
        $region43: #{tpu_custom_call.1} parent=35 // pred_region
          %253 = dma.done %s246, 64
        $region44: #{tpu_custom_call.1} parent=35 // pred_fallthru
          _
        %s254 = sand.u32 %s46, 1
        %s255 = scalar_lea.sflag [#allocation4], %s254
        %s256 = sand.u32 %s46, 1
        %s257 = smul.addr %s256, 12
        %s258 = scalar_lea.vmem [#allocation3], %s257
        %p259 = pneg %p59
        %p260 = pneg %p56
        %s261 = sand.u32 %s78, 1
        %s262 = scalar_lea.sflag [#allocation7], %s261
        %s263 = sand.u32 %s78, 1
        %s264 = smul.addr %s263, 4
        %s265 = scalar_lea.vmem [#allocation6], %s264
        %p266 = pneg %p91
        %p267 = pneg %p88
        %p268 = pneg %p112
        %p269 = pneg %p109
        %p270 = pneg %p133
        %p271 = pneg %p130
        %p272 = pneg %p161
        %p273 = pneg %p158
        %s274 = sand.u32 %s148, 1
        %s275 = scalar_lea.sflag [#allocation5], %s274
        %s276 = sand.u32 %s148, 1
        %s277 = smul.addr %s276, 24
        %s278 = scalar_lea.vmem [#allocation8], %s277
        %s279 = smul.u32 3, %s29
        %s280 = sadd.s32 %s29, 1
        %s281 = smul.u32 %s280, 3
        %s282 = smul.u32 3, %s29
        %v283 = vld [vmem:[%s240] sm:$0xff]
        %v284 = vld [vmem:[%s240 + $0x8] sm:$0xf]
        %v285 = vld [vmem:[%s249] sm:$0xf]
        %v288 = vcombine.high %v283, %v283
        %290 = vst [vmem:[#allocation2] sm:$0xf] %v283
        %291 = vst [vmem:[#allocation2 + $0x8] sm:$0xf] %v288
        %292 = vst [vmem:[#allocation2 + $0x10] sm:$0xf] %v284
        %v294 = vrot.slane %v283, 4
        %v295 = vrot.slane %v288, 4
        %v296 = vrot.slane %v284, 4
        %v297 = vrot.slane %v285, 4
        %298 = vrot.lane.b32.xlu0 %v294, 127
        %v299 = vpop.permute.xlu0 %298
        %300 = vrot.lane.b32.xlu0 %v295, 127
        %v301 = vpop.permute.xlu0 %300
        %302 = vrot.lane.b32.xlu0 %v296, 127
        %v303 = vpop.permute.xlu0 %302
        %304 = vrot.lane.b32.xlu0 %v297, 127
        %v305 = vpop.permute.xlu0 %304
        %vm306 = vcmask 1039360
        %v307 = vsel %vm306, %v299, %v301
        %v308 = vsel %vm306, %v301, %v303
        %v309 = vsel %vm306, %v303, %v305
        %313 = vst [vmem:[#allocation2] sm:$0xf0] %v307
        %314 = vst [vmem:[#allocation2 + $0x8] sm:$0xf0] %v308
        %315 = vst [vmem:[#allocation2 + $0x10] sm:$0xf0] %v309
        %316 = vrot.lane.b32.xlu0 %v283, 126
        %v317 = vpop.permute.xlu0 %316
        %318 = vrot.lane.b32.xlu0 %v288, 126
        %v319 = vpop.permute.xlu0 %318
        %320 = vrot.lane.b32.xlu0 %v284, 126
        %v321 = vpop.permute.xlu0 %320
        %322 = vrot.lane.b32.xlu0 %v285, 126
        %v323 = vpop.permute.xlu0 %322
        %vm324 = vcmask 1031168
        %v325 = vsel %vm324, %v317, %v319
        %v326 = vsel %vm324, %v319, %v321
        %v327 = vsel %vm324, %v321, %v323
        %331 = vst [vmem:[#allocation2 + $0x18] sm:$0xf] %v325
        %332 = vst [vmem:[#allocation2 + $0x20] sm:$0xf] %v326
        %333 = vst [vmem:[#allocation2 + $0x28] sm:$0xf] %v327
        %334 = vrot.lane.b32.xlu0 %v294, 110
        %v335 = vpop.permute.xlu0 %334
        %336 = vrot.lane.b32.xlu0 %v295, 110
        %v337 = vpop.permute.xlu0 %336
        %338 = vrot.lane.b32.xlu0 %v296, 110
        %v339 = vpop.permute.xlu0 %338
        %340 = vrot.lane.b32.xlu0 %v297, 110
        %v341 = vpop.permute.xlu0 %340
        %vm342 = vcmask 900096
        %v343 = vsel %vm342, %v335, %v337
        %v344 = vsel %vm342, %v337, %v339
        %v345 = vsel %vm342, %v339, %v341
        %349 = vst [vmem:[#allocation2 + $0x18] sm:$0xf0] %v343
        %350 = vst [vmem:[#allocation2 + $0x20] sm:$0xf0] %v344
        %351 = vst [vmem:[#allocation2 + $0x28] sm:$0xf0] %v345
        %352 = vrot.lane.b32.xlu0 %v283, 109
        %v353 = vpop.permute.xlu0 %352
        %354 = vrot.lane.b32.xlu0 %v288, 109
        %v355 = vpop.permute.xlu0 %354
        %356 = vrot.lane.b32.xlu0 %v284, 109
        %v357 = vpop.permute.xlu0 %356
        %358 = vrot.lane.b32.xlu0 %v285, 109
        %v359 = vpop.permute.xlu0 %358
        %vm360 = vcmask 891904
        %v361 = vsel %vm360, %v353, %v355
        %v362 = vsel %vm360, %v355, %v357
        %v363 = vsel %vm360, %v357, %v359
        %367 = vst [vmem:[#allocation2 + $0x30] sm:$0xf] %v361
        %368 = vst [vmem:[#allocation2 + $0x38] sm:$0xf] %v362
        %369 = vst [vmem:[#allocation2 + $0x40] sm:$0xf] %v363
        %370 = vrot.lane.b32.xlu0 %v294, 108
        %v371 = vpop.permute.xlu0 %370
        %372 = vrot.lane.b32.xlu0 %v295, 108
        %v373 = vpop.permute.xlu0 %372
        %374 = vrot.lane.b32.xlu0 %v296, 108
        %v375 = vpop.permute.xlu0 %374
        %376 = vrot.lane.b32.xlu0 %v297, 108
        %v377 = vpop.permute.xlu0 %376
        %vm378 = vcmask 883712
        %v379 = vsel %vm378, %v371, %v373
        %v380 = vsel %vm378, %v373, %v375
        %v381 = vsel %vm378, %v375, %v377
        %385 = vst [vmem:[#allocation2 + $0x30] sm:$0xf0] %v379
        %386 = vst [vmem:[#allocation2 + $0x38] sm:$0xf0] %v380
        %387 = vst [vmem:[#allocation2 + $0x40] sm:$0xf0] %v381
        %388 = vrot.lane.b32.xlu0 %v283, 92
        %v389 = vpop.permute.xlu0 %388
        %390 = vrot.lane.b32.xlu0 %v288, 92
        %v391 = vpop.permute.xlu0 %390
        %392 = vrot.lane.b32.xlu0 %v284, 92
        %v393 = vpop.permute.xlu0 %392
        %394 = vrot.lane.b32.xlu0 %v285, 92
        %v395 = vpop.permute.xlu0 %394
        %vm396 = vcmask 752640
        %v397 = vsel %vm396, %v389, %v391
        %v398 = vsel %vm396, %v391, %v393
        %v399 = vsel %vm396, %v393, %v395
        %403 = vst [vmem:[#allocation2 + $0x48] sm:$0xf] %v397
        %404 = vst [vmem:[#allocation2 + $0x50] sm:$0xf] %v398
        %405 = vst [vmem:[#allocation2 + $0x58] sm:$0xf] %v399
        %406 = vrot.lane.b32.xlu0 %v294, 91
        %v407 = vpop.permute.xlu0 %406
        %408 = vrot.lane.b32.xlu0 %v295, 91
        %v409 = vpop.permute.xlu0 %408
        %410 = vrot.lane.b32.xlu0 %v296, 91
        %v411 = vpop.permute.xlu0 %410
        %412 = vrot.lane.b32.xlu0 %v297, 91
        %v413 = vpop.permute.xlu0 %412
        %vm414 = vcmask 744448
        %v415 = vsel %vm414, %v407, %v409
        %v416 = vsel %vm414, %v409, %v411
        %v417 = vsel %vm414, %v411, %v413
        %421 = vst [vmem:[#allocation2 + $0x48] sm:$0xf0] %v415
        %422 = vst [vmem:[#allocation2 + $0x50] sm:$0xf0] %v416
        %423 = vst [vmem:[#allocation2 + $0x58] sm:$0xf0] %v417
        %424 = vrot.lane.b32.xlu0 %v283, 90
        %v425 = vpop.permute.xlu0 %424
        %426 = vrot.lane.b32.xlu0 %v288, 90
        %v427 = vpop.permute.xlu0 %426
        %428 = vrot.lane.b32.xlu0 %v284, 90
        %v429 = vpop.permute.xlu0 %428
        %430 = vrot.lane.b32.xlu0 %v285, 90
        %v431 = vpop.permute.xlu0 %430
        %vm432 = vcmask 736256
        %v433 = vsel %vm432, %v425, %v427
        %v434 = vsel %vm432, %v427, %v429
        %v435 = vsel %vm432, %v429, %v431
        %439 = vst [vmem:[#allocation2 + $0x60] sm:$0xf] %v433
        %440 = vst [vmem:[#allocation2 + $0x68] sm:$0xf] %v434
        %441 = vst [vmem:[#allocation2 + $0x70] sm:$0xf] %v435
        %v442 = vld [vmem:[%s2] sm:$0xff]
        %v443 = vld [vmem:[#allocation2] sm:$0xff]
        %v444 = vld [vmem:[#allocation2 + $0x8] sm:$0xff]
        %v445 = vld [vmem:[#allocation2 + $0x10] sm:$0xff]
        %v446 = vld [vmem:[#allocation2 + $0x18] sm:$0xff]
        %v447 = vld [vmem:[#allocation2 + $0x20] sm:$0xff]
        %v448 = vld [vmem:[#allocation2 + $0x28] sm:$0xff]
        %v449 = vld [vmem:[#allocation2 + $0x30] sm:$0xff]
        %v450 = vld [vmem:[#allocation2 + $0x38] sm:$0xff]
        %v451 = vld [vmem:[#allocation2 + $0x40] sm:$0xff]
        %v452 = vld [vmem:[#allocation2 + $0x48] sm:$0xff]
        %v453 = vld [vmem:[#allocation2 + $0x50] sm:$0xff]
        %v454 = vld [vmem:[#allocation2 + $0x58] sm:$0xff]
        %v455 = vld [vmem:[#allocation2 + $0x60] sm:$0xf]
        %v456 = vld [vmem:[#allocation2 + $0x68] sm:$0xf]
        %v457 = vld [vmem:[#allocation2 + $0x70] sm:$0xf]
        %v458 = vld [vmem:[%s3] sm:$0xff]
        %460 = vset.pattern.permute.xlu0 0
        %461 = vperm.xlu0 %460, %v458
        %v462 = vpop.permute.xlu0 %461
        %vm464 = vcmask 293888
        %v466 = vsel %vm464, %v442, 0
        %vm468 = vcmask 1043456
        %v470 = vsel %vm468, %v455, 0
        %v473 = vsel %vm468, %v456, 0
        %v476 = vsel %vm468, %v457, 0
        %478 = vmatprep.subr.mxu0 %v444
        %479 = vmatpush1.msra.mxu0 %v443
        %480 = vmatprep.subr.mxu0 %v447
        %481 = vmatpush1.msra.mxu0 %v446
        %482 = vmatprep.subr.mxu0 %v450
        %483 = vmatpush1.msra.mxu0 %v449
        %484 = vmatprep.subr.mxu0 %v453
        %485 = vmatpush1.msra.mxu0 %v452
        %486 = vmatprep.subr.mxu0 %v473
        %487 = vmatpush1.msra.mxu0 %v470
        %488 = vmatprep.subr.mxu0 0.0
        %489 = vmatpush1.msra.mxu0 0.0
        %490 = vmatprep.subr.mxu0 0.0
        %491 = vmatpush1.msra.mxu0 0.0
        %492 = vmatprep.subr.mxu0 0.0
        %493 = vmatpush1.msra.mxu0 0.0
        %494 = vmatprep.subr.mxu0 0.0
        %495 = vmatpush1.msra.mxu0 0.0
        %496 = vmatprep.subr.mxu0 0.0
        %497 = vmatpush1.msra.mxu0 0.0
        %498 = vmatprep.subr.mxu0 0.0
        %499 = vmatpush1.msra.mxu0 0.0
        %500 = vmatprep.subr.mxu0 0.0
        %501 = vmatpush1.msra.mxu0 0.0
        %502 = vmatprep.subr.mxu0 0.0
        %503 = vmatpush1.msra.mxu0 0.0
        %504 = vmatprep.subr.mxu0 0.0
        %505 = vmatpush1.msra.mxu0 0.0
        %506 = vmatprep.subr.mxu0 0.0
        %507 = vmatpush1.msra.mxu0 0.0
        %508 = vmatprep.subr.mxu0 0.0
        %509 = vmatpush1.msra.mxu0 0.0
        %510 = vmatprep.subr.mxu0 0.0
        %511 = vmatpush1.msra.mxu0 0.0
        %512 = vmatprep.subr.mxu0 0.0
        %513 = vmatpush1.msra.mxu0 0.0
        %514 = vmatprep.subr.mxu0 0.0
        %515 = vmatpush1.msra.mxu0 0.0
        %516 = vmatprep.subr.mxu0 0.0
        %517 = vmatpush1.msra.mxu0 0.0
        %518 = vmatprep.subr.mxu0 0.0
        %519 = vmatpush1.msra.mxu0 0.0
        %520 = vmatprep.subr.mxu0 0.0
        %521 = vmatpush1.msra.mxu0 0.0
        %522 = vmatprep.subr.mxu0 0.0
        %523 = vmatpush1.msra.mxu0 0.0
        %524 = vmatprep.subr.mxu0 0.0
        %525 = vmatpush1.msra.mxu0 0.0
        %526 = vmatprep.subr.mxu0 0.0
        %527 = vmatpush1.msra.mxu0 0.0
        %528 = vmatprep.subr.mxu0 0.0
        %529 = vmatpush1.msra.mxu0 0.0
        %530 = vmatprep.subr.mxu0 0.0
        %531 = vmatpush1.msra.mxu0 0.0
        %532 = vmatprep.subr.mxu0 0.0
        %533 = vmatpush1.msra.mxu0 0.0
        %534 = vmatprep.subr.mxu0 0.0
        %535 = vmatpush1.msra.mxu0 0.0
        %536 = vmatprep.subr.mxu0 0.0
        %537 = vmatpush1.msra.mxu0 0.0
        %538 = vmatprep.subr.mxu0 0.0
        %539 = vmatpush1.msra.mxu0 0.0
        %540 = vmatprep.subr.mxu0 0.0
        %541 = vmatpush1.msra.mxu0 0.0
        %542 = vmatprep.mubr.f32.mxu0 0.0
        %543 = vmatmul.mubr.f32.gmra.mrb[0].mxu0 %v466
        %v544 = vpop.f32.mrb[0].mxu0
        %v545 = vadd.f32 %v462, %v544
        %v546 = vpop.f32.mrb[0].mxu0
        %v547 = vadd.f32 %v462, %v546
        %548 = vdwg.mxu0
        %549 = vmatprep.subr.mxu0 0.0
        %550 = vmatpush1.msra.mxu0 %v445
        %551 = vmatprep.subr.mxu0 0.0
        %552 = vmatpush1.msra.mxu0 %v448
        %553 = vmatprep.subr.mxu0 0.0
        %554 = vmatpush1.msra.mxu0 %v451
        %555 = vmatprep.subr.mxu0 0.0
        %556 = vmatpush1.msra.mxu0 %v454
        %557 = vmatprep.subr.mxu0 0.0
        %558 = vmatpush1.msra.mxu0 %v476
        %559 = vmatprep.subr.mxu0 0.0
        %560 = vmatpush1.msra.mxu0 0.0
        %561 = vmatprep.subr.mxu0 0.0
        %562 = vmatpush1.msra.mxu0 0.0
        %563 = vmatprep.subr.mxu0 0.0
        %564 = vmatpush1.msra.mxu0 0.0
        %565 = vmatprep.subr.mxu0 0.0
        %566 = vmatpush1.msra.mxu0 0.0
        %567 = vmatprep.subr.mxu0 0.0
        %568 = vmatpush1.msra.mxu0 0.0
        %569 = vmatprep.subr.mxu0 0.0
        %570 = vmatpush1.msra.mxu0 0.0
        %571 = vmatprep.subr.mxu0 0.0
        %572 = vmatpush1.msra.mxu0 0.0
        %573 = vmatprep.subr.mxu0 0.0
        %574 = vmatpush1.msra.mxu0 0.0
        %575 = vmatprep.subr.mxu0 0.0
        %576 = vmatpush1.msra.mxu0 0.0
        %577 = vmatprep.subr.mxu0 0.0
        %578 = vmatpush1.msra.mxu0 0.0
        %579 = vmatprep.subr.mxu0 0.0
        %580 = vmatpush1.msra.mxu0 0.0
        %581 = vmatprep.subr.mxu0 0.0
        %582 = vmatpush1.msra.mxu0 0.0
        %583 = vmatprep.subr.mxu0 0.0
        %584 = vmatpush1.msra.mxu0 0.0
        %585 = vmatprep.subr.mxu0 0.0
        %586 = vmatpush1.msra.mxu0 0.0
        %587 = vmatprep.subr.mxu0 0.0
        %588 = vmatpush1.msra.mxu0 0.0
        %589 = vmatprep.subr.mxu0 0.0
        %590 = vmatpush1.msra.mxu0 0.0
        %591 = vmatprep.subr.mxu0 0.0
        %592 = vmatpush1.msra.mxu0 0.0
        %593 = vmatprep.subr.mxu0 0.0
        %594 = vmatpush1.msra.mxu0 0.0
        %595 = vmatprep.subr.mxu0 0.0
        %596 = vmatpush1.msra.mxu0 0.0
        %597 = vmatprep.subr.mxu0 0.0
        %598 = vmatpush1.msra.mxu0 0.0
        %599 = vmatprep.subr.mxu0 0.0
        %600 = vmatpush1.msra.mxu0 0.0
        %601 = vmatprep.subr.mxu0 0.0
        %602 = vmatpush1.msra.mxu0 0.0
        %603 = vmatprep.subr.mxu0 0.0
        %604 = vmatpush1.msra.mxu0 0.0
        %605 = vmatprep.subr.mxu0 0.0
        %606 = vmatpush1.msra.mxu0 0.0
        %607 = vmatprep.subr.mxu0 0.0
        %608 = vmatpush1.msra.mxu0 0.0
        %609 = vmatprep.subr.mxu0 0.0
        %610 = vmatpush1.msra.mxu0 0.0
        %611 = vmatprep.subr.mxu0 0.0
        %612 = vmatpush1.msra.mxu0 0.0
        %613 = vmatprep.mubr.f32.mxu0 0.0
        %614 = vmatmul.mubr.f32.gmra.mrb[0].mxu0 %v466
        %v615 = vpop.f32.mrb[0].mxu0
        %v616 = vadd.f32 %v462, %v615
        %v617 = vpop.f32.mrb[0].mxu0
        %618 = vdwg.mxu0
        %vm619 = vcmp.gt.f32.partialorder %v545, 0.0
        %vm620 = vcmp.gt.f32.partialorder %v547, 0.0
        %vm621 = vcmp.gt.f32.partialorder %v616, 0.0
        %v622 = vmul.f32 %v545, 0.2
        %v623 = vmul.f32 %v547, 0.2
        %v624 = vmul.f32 %v616, 0.2
        %v625 = vsel %vm619, %v545, %v622
        %v626 = vsel %vm620, %v547, %v623
        %v627 = vsel %vm621, %v616, %v624
        %628 = vst [vmem:[%s278] sm:$0xff] %v625
        %629 = vst [vmem:[%s278 + $0x8] sm:$0xff] %v626
        %630 = vst [vmem:[%s278 + $0x10] sm:$0xff] %v627
        %s631 = sand.u32 %s148, 1
        %s632 = scalar_lea.sflag [#allocation5], %s631
        %s633 = sand.u32 %s148, 1
        %s634 = smul.addr %s633, 24
        %s635 = scalar_lea.vmem [#allocation8], %s634
        // Predicated region
        $region45: #{tpu_custom_call.1} parent=35 // pred_check
          %p636 = pneg %p158
        $region46: #{tpu_custom_call.1} parent=35 // pred_check_branch
          %638 = sbr.rel (%p636) target = $region48
        $region47: #{tpu_custom_call.1} parent=35 // pred_region
          %s639 = smul.u32 3, %s29
          %s641 = ssub.s32 384, 384
          %642 = vsyncadd %s632, %s641
          %s643 = smul.addr %s28, 3
          %s644 = sadd.s32 %s639, %s643
          %s645 = smul.addr %s644, 128
          %s646 = scalar_lea.hbm %s4, %s645
          %s648 = sshll.u32 %s635, 4
          %s649 = int_to_ptr.vmem [resolvable:$true] %s648
          %651 = dma.vmem_to_hbm [thread:$0]  %s649, 384, %s646, %s632
        $region48: #{tpu_custom_call.1} parent=35 // pred_fallthru
          _
      $region36: #{tpu_custom_call.1} parent=5 // pred_fallthru
        _
      %p652 = scmp.le.s32.totalorder 2, %s19
      // Predicated region
      $region49: #{tpu_custom_call.1} parent=5 // pred_check
        %p653 = pneg %p652
      $region50: #{tpu_custom_call.1} parent=5 // pred_check_branch
        %655 = sbr.rel (%p653) target = $region52
      $region51: #{tpu_custom_call.1} parent=5 // pred_region
        %s656 = ssub.s32 %s19, 2
        // Predicated region
        $region53: #{tpu_custom_call.1} parent=51 // pred_check
          %p657 = pneg %p164
        $region54: #{tpu_custom_call.1} parent=51 // pred_check_branch
          %659 = sbr.rel (%p657) target = $region56
        $region55: #{tpu_custom_call.1} parent=51 // pred_region
          %s660 = sand.u32 %s149, 1
          %s661 = scalar_lea.sflag [#allocation5], %s660
          %s662 = sand.u32 %s149, 1
          %s663 = smul.addr %s662, 24
          %s664 = scalar_lea.vmem [#allocation8], %s663
          %665 = dma.done %s661, 384
        $region56: #{tpu_custom_call.1} parent=51 // pred_fallthru
          _
      $region52: #{tpu_custom_call.1} parent=5 // pred_fallthru
        _
    $region6: #{tpu_custom_call.1} parent=1 // loop_footer
      %s23 = sadd.s32 1, %s19
    $region7: #{tpu_custom_call.1} parent=1 // loop_footer_branch
      %18 = sbr.rel target = $region3
    $region8: #{tpu_custom_call.1} parent=1 // loop_exit
      _
    %666 = vsyncpa [#allocation4], 1
    %s667 = scalar_lea.sflag [#allocation4], 1
    %668 = vsyncpa %s667, 1
    %669 = vsyncpa [#allocation7], 1
    %s670 = scalar_lea.sflag [#allocation7], 1
    %671 = vsyncpa %s670, 1
    %672 = vsyncpa [#allocation5], 1
    %s673 = scalar_lea.sflag [#allocation5], 1
    %674 = vsyncpa %s673, 1

</llo_original>
